<compile_context>
chip_gen: v6e
topology: v6e:2x2x1
jax: 0.10.0
libtpu: 0.0.40
codegen_flags: <defaults>
</compile_context>

<pallas_src>
import functools
import math

import jax
import jax.numpy as jnp
from jax.experimental import pallas as pl
from jax.experimental.pallas import tpu as pltpu

LN_EPS = 1e-12                     # Electra layer_norm_eps default
VMEM_LIMIT = 48 * 1024 * 1024      # safe on v7x (64 MiB physical) and below


def _gelu(x):
    # TODO(synk): HF Electra uses exact erf-GELU; tanh-approx GELU is used because
    # erf has no reliable Mosaic TPU lowering (difference is ~1e-3).
    return jax.nn.gelu(x, approximate=True)


def _pick_tile(dim, target, align):
    """Largest tile <= target that is the full dim or an align-multiple divisor."""
    if dim <= target:
        return dim
    t = (target // align) * align
    while t >= align:
        if dim % t == 0:
            return t
        t -= align
    return dim


# ----------------------------- Pallas kernels ------------------------------ #

def _linear_kernel(x_ref, w_ref, b_ref, o_ref, acc_ref, *, activation):
    # Tiled y = x @ W (+ b, optional GELU); K is the innermost (last) grid axis.
    @pl.when(pl.program_id(2) == 0)
    def _():
        acc_ref[...] = jnp.zeros_like(acc_ref)

    acc_ref[...] += jnp.dot(x_ref[...], w_ref[...],
                            preferred_element_type=jnp.float32)

    @pl.when(pl.program_id(2) == pl.num_programs(2) - 1)
    def _():
        y = acc_ref[...] + b_ref[...].astype(jnp.float32)
        if activation == "gelu":
            y = _gelu(y)
        o_ref[...] = y.astype(o_ref.dtype)


def _linear_add_ln_kernel(x_ref, w_ref, b_ref, res_ref, g_ref, beta_ref, o_ref,
                          acc_ref, *, eps):
    # Tiled y = LayerNorm(x @ W + b + residual); full hidden dim in one N block.
    @pl.when(pl.program_id(1) == 0)
    def _():
        acc_ref[...] = jnp.zeros_like(acc_ref)

    acc_ref[...] += jnp.dot(x_ref[...], w_ref[...],
                            preferred_element_type=jnp.float32)

    @pl.when(pl.program_id(1) == pl.num_programs(1) - 1)
    def _():
        y = (acc_ref[...] + b_ref[...].astype(jnp.float32)
             + res_ref[...].astype(jnp.float32))
        mean = jnp.mean(y, axis=-1, keepdims=True)
        var = jnp.mean(jnp.square(y - mean), axis=-1, keepdims=True)
        y = (y - mean) * jax.lax.rsqrt(var + eps)
        o_ref[...] = (y * g_ref[...].astype(jnp.float32)
                      + beta_ref[...].astype(jnp.float32)).astype(o_ref.dtype)


def _embed_ln_proj_kernel(xe_ref, pos_ref, tt_ref, g_ref, beta_ref, w_ref, b_ref,
                          o_ref, *, eps):
    # Fused: x = inputs_embeds + pos_emb + token_type_emb(0); LayerNorm; x @ W + b.
    x = (xe_ref[...].astype(jnp.float32)
         + pos_ref[...].astype(jnp.float32)
         + tt_ref[...].astype(jnp.float32))
    mean = jnp.mean(x, axis=-1, keepdims=True)
    var = jnp.mean(jnp.square(x - mean), axis=-1, keepdims=True)
    y = (x - mean) * jax.lax.rsqrt(var + eps)
    y = y * g_ref[...].astype(jnp.float32) + beta_ref[...].astype(jnp.float32)
    o_ref[...] = (jnp.dot(y.astype(jnp.bfloat16), w_ref[...],
                          preferred_element_type=jnp.float32)
                  + b_ref[...].astype(jnp.float32)).astype(o_ref.dtype)


def _flash_attn_kernel(q_ref, k_ref, v_ref, mask_ref, o_ref,
                       m_sc, l_sc, acc_sc, *, scale):
    # One (batch, head) pair per (i, j) grid point; online softmax over KV tiles.
    # q_ref: (S, Dh), k_ref/v_ref: (tkv, Dh), mask_ref: (1, tkv), o_ref: (S, Dh).
    kv = pl.program_id(2)

    @pl.when(kv == 0)
    def _():
        m_sc[...] = jnp.full_like(m_sc, -jnp.inf)
        l_sc[...] = jnp.zeros_like(l_sc)
        acc_sc[...] = jnp.zeros_like(acc_sc)

    s = jax.lax.dot_general(q_ref[...], k_ref[...], (((1,), (1,)), ((), ())),
                            preferred_element_type=jnp.float32) * scale
    s = s + (1.0 - mask_ref[...].astype(jnp.float32)) * -10000.0      # (S, tkv)

    m_prev = m_sc[...]
    m_new = jnp.maximum(m_prev, jnp.max(s, axis=-1, keepdims=True))
    alpha = jnp.exp(m_prev - m_new)
    p = jnp.exp(s - m_new)
    l_sc[...] = alpha * l_sc[...] + jnp.sum(p, axis=-1, keepdims=True)
    acc_sc[...] = alpha * acc_sc[...] + jnp.dot(p.astype(jnp.bfloat16), v_ref[...],
                                                preferred_element_type=jnp.float32)
    m_sc[...] = m_new

    @pl.when(kv == pl.num_programs(2) - 1)
    def _():
        o_ref[...] = (acc_sc[...]
                      * pl.reciprocal(l_sc[...], approx=True)).astype(o_ref.dtype)


def _logit_loss_kernel(d_ref, dpw_ref, dpb_ref, mask_ref, lab_ref,
                       loss_ref, scores_ref, num_ref, den_ref):
    # Lane-dense logit reduce (N=1 dense_prediction as a 1-row matmul) +
    # masked BCE-with-logits + exact sigmoid.  Loss accumulated over the grid.
    i = pl.program_id(0)

    @pl.when(i == 0)
    def _():
        num_ref[...] = jnp.zeros_like(num_ref)
        den_ref[...] = jnp.zeros_like(den_ref)

    d = d_ref[...].astype(jnp.float32)                                 # (tm, H)
    logits = (jax.lax.dot_general(dpw_ref[...].astype(jnp.float32), d,
                                  (((1,), (1,)), ((), ())),
                                  preferred_element_type=jnp.float32)
              + dpb_ref[...].astype(jnp.float32))                      # (1, tm)

    y = lab_ref[...].astype(jnp.float32)                               # (1, tm)
    m = mask_ref[...].astype(jnp.float32)                              # (1, tm)
    per = (jnp.maximum(logits, 0.0) - logits * y
           + jnp.log(1.0 + jnp.exp(-jnp.abs(logits))))                 # stable BCE
    num_ref[...] += jnp.sum(per * m, axis=(0, 1), keepdims=True)
    den_ref[...] += jnp.sum(m, axis=(0, 1), keepdims=True)
    scores_ref[...] = 1.0 / (1.0 + jnp.exp(-logits))                   # exact sigmoid

    @pl.when(i == pl.num_programs(0) - 1)
    def _():
        loss_ref[...] = num_ref[...] / jnp.maximum(den_ref[...], 1.0)  # NaN guard


# ----------------------------- Pallas wrappers ----------------------------- #

def pallas_linear(x2d, w, b, activation="none", out_dtype=jnp.bfloat16):
    M, K = x2d.shape
    _, N = w.shape
    tm = _pick_tile(M, 512, 16)      # 16-aligned: bf16 sublane packing
    tn = _pick_tile(N, 512, 256)
    tk = _pick_tile(K, 1024, 256)
    return pl.pallas_call(
        functools.partial(_linear_kernel, activation=activation),
        grid=(M // tm, N // tn, K // tk),
        out_shape=jax.ShapeDtypeStruct((M, N), out_dtype),
        in_specs=[pl.BlockSpec((tm, tk), lambda i, j, k: (i, k)),
                  pl.BlockSpec((tk, tn), lambda i, j, k: (k, j)),
                  pl.BlockSpec((1, tn), lambda i, j, k: (0, j))],
        out_specs=pl.BlockSpec((tm, tn), lambda i, j, k: (i, j)),
        scratch_shapes=[pltpu.VMEM((tm, tn), jnp.float32)],
        compiler_params=pltpu.CompilerParams(
            dimension_semantics=("parallel", "parallel", "arbitrary"),
            vmem_limit_bytes=VMEM_LIMIT),
    )(x2d, w, b)


def pallas_linear_add_ln(x2d, w, b, res2d, gamma, beta):
    M, K = x2d.shape
    _, N = w.shape                    # N = hidden size, kept as one block for LN
    tm = _pick_tile(M, 512, 16)
    tk = _pick_tile(K, 1024, 256)
    return pl.pallas_call(
        functools.partial(_linear_add_ln_kernel, eps=LN_EPS),
        grid=(M // tm, K // tk),
        out_shape=jax.ShapeDtypeStruct((M, N), jnp.bfloat16),
        in_specs=[pl.BlockSpec((tm, tk), lambda i, k: (i, k)),
                  pl.BlockSpec((tk, N), lambda i, k: (k, 0)),
                  pl.BlockSpec((1, N), lambda i, k: (0, 0)),
                  pl.BlockSpec((tm, N), lambda i, k: (i, 0)),
                  pl.BlockSpec((1, N), lambda i, k: (0, 0)),
                  pl.BlockSpec((1, N), lambda i, k: (0, 0))],
        out_specs=pl.BlockSpec((tm, N), lambda i, k: (i, 0)),
        scratch_shapes=[pltpu.VMEM((tm, N), jnp.float32)],
        compiler_params=pltpu.CompilerParams(
            dimension_semantics=("parallel", "arbitrary"),
            vmem_limit_bytes=VMEM_LIMIT),
    )(x2d, w, b, res2d, gamma, beta)


def pallas_embed_ln_proj(xe, pos, tt, gamma, beta, w, b):
    # Fused embedding-sum + LayerNorm + embeddings_project (E -> H).
    B, S, E = xe.shape
    _, H = w.shape
    tn = _pick_tile(H, 512, 128)
    return pl.pallas_call(
        functools.partial(_embed_ln_proj_kernel, eps=LN_EPS),
        grid=(B, H // tn),
        out_shape=jax.ShapeDtypeStruct((B, S, H), jnp.bfloat16),
        in_specs=[pl.BlockSpec((None, S, E), lambda bb, j: (bb, 0, 0)),
                  pl.BlockSpec((S, E), lambda bb, j: (0, 0)),
                  pl.BlockSpec((1, E), lambda bb, j: (0, 0)),
                  pl.BlockSpec((1, E), lambda bb, j: (0, 0)),
                  pl.BlockSpec((1, E), lambda bb, j: (0, 0)),
                  pl.BlockSpec((E, tn), lambda bb, j: (0, j)),
                  pl.BlockSpec((1, tn), lambda bb, j: (0, j))],
        out_specs=pl.BlockSpec((None, S, tn), lambda bb, j: (bb, 0, j)),
        compiler_params=pltpu.CompilerParams(
            dimension_semantics=("parallel", "parallel"),
            vmem_limit_bytes=VMEM_LIMIT),
    )(xe, pos, tt, gamma, beta, w, b)


def pallas_attention(qkv2d, mask_att, B, S, num_heads, head_dim, scale):
    # Lane-aligned per-head layout: (B, nH, S, Dh) for Q/K/V; flash-style KV tiling.
    H = num_heads * head_dim
    qkv5 = qkv2d.reshape(B, S, 3, num_heads, head_dim)
    qkv5 = jnp.transpose(qkv5, (2, 0, 3, 1, 4))           # (3, B, nH, S, Dh)
    q, k, v = qkv5[0], qkv5[1], qkv5[2]
    tkv = _pick_tile(S, 512, 128)
    ctx = pl.pallas_call(
        functools.partial(_flash_attn_kernel, scale=scale),
        grid=(B, num_heads, S // tkv),
        out_shape=jax.ShapeDtypeStruct((B, num_heads, S, head_dim), jnp.bfloat16),
        in_specs=[
            pl.BlockSpec((None, None, S, head_dim), lambda b, h, kv: (b, h, 0, 0)),
            pl.BlockSpec((None, None, tkv, head_dim), lambda b, h, kv: (b, h, kv, 0)),
            pl.BlockSpec((None, None, tkv, head_dim), lambda b, h, kv: (b, h, kv, 0)),
            pl.BlockSpec((None, 1, tkv), lambda b, h, kv: (b, 0, kv))],
        out_specs=pl.BlockSpec((None, None, S, head_dim),
                               lambda b, h, kv: (b, h, 0, 0)),
        scratch_shapes=[pltpu.VMEM((S, 1), jnp.float32),
                        pltpu.VMEM((S, 1), jnp.float32),
                        pltpu.VMEM((S, head_dim), jnp.float32)],
        compiler_params=pltpu.CompilerParams(
            dimension_semantics=("parallel", "parallel", "arbitrary"),
            vmem_limit_bytes=VMEM_LIMIT),
    )(q, k, v, mask_att)
    return jnp.transpose(ctx, (0, 2, 1, 3)).reshape(B * S, H)


def pallas_logit_loss(d2d, dp_w_row, dp_b, mask_row, labels_row):
    # d2d: (B*S, H) from the tiled dense+GELU; mask/labels/scores are lane-dense
    # (1, B*S) rows.  Grid axis is a reduction (num/den) -> keep it "arbitrary".
    M, H = d2d.shape
    tm = _pick_tile(M, 1024, 128)
    loss, scores = pl.pallas_call(
        _logit_loss_kernel,
        grid=(M // tm,),
        out_shape=(jax.ShapeDtypeStruct((1, 1), jnp.float32),
                   jax.ShapeDtypeStruct((1, M), jnp.float32)),
        in_specs=[pl.BlockSpec((tm, H), lambda i: (i, 0)),
                  pl.BlockSpec((1, H), lambda i: (0, 0)),
                  pl.BlockSpec((1, 1), lambda i: (0, 0)),
                  pl.BlockSpec((1, tm), lambda i: (0, i)),
                  pl.BlockSpec((1, tm), lambda i: (0, i))],
        out_specs=[pl.BlockSpec((1, 1), lambda i: (0, 0)),
                   pl.BlockSpec((1, tm), lambda i: (0, i))],
        scratch_shapes=[pltpu.VMEM((1, 1), jnp.float32),
                        pltpu.VMEM((1, 1), jnp.float32)],
        compiler_params=pltpu.CompilerParams(
            dimension_semantics=("arbitrary",),
            vmem_limit_bytes=VMEM_LIMIT),
    )(d2d, dp_w_row, dp_b, mask_row, labels_row)
    return loss, scores


# ----------------------------- model definition ---------------------------- #

def init_params(key, cfg):
    E, H, I = cfg["embedding_size"], cfg["hidden_size"], cfg["intermediate_size"]
    V, P = cfg["vocab_size"], cfg["max_position_embeddings"]
    keys = iter(jax.random.split(key, 128))
    f32, bf16 = jnp.float32, jnp.bfloat16
    nrm = lambda shape, dt=bf16: (0.02 * jax.random.normal(next(keys), shape, f32)
                                  ).astype(dt)
    params = {
        "embed_weight": nrm((V, E), f32),     # outer nn.Embedding (given embeddings)
        "pos_emb": nrm((P, E), f32),
        "tok_type_emb": nrm((2, E), f32),
        "emb_ln_g": jnp.ones((1, E), f32),
        "emb_ln_b": jnp.zeros((1, E), f32),
        "proj_w": nrm((E, H)),                # embeddings_project (E != H)
        "proj_b": jnp.zeros((1, H), f32),
        "dh_w": nrm((H, H)),                  # discriminator_predictions.dense
        "dh_b": jnp.zeros((1, H), f32),
        "dp_w": nrm((1, H), f32),             # dense_prediction weight as lane row
        "dp_b": jnp.zeros((1, 1), f32),
        "layers": [],
    }
    for _ in range(cfg["num_hidden_layers"]):
        params["layers"].append({
            "qkv_w": nrm((H, 3 * H)),         # fused Q | K | V projection
            "qkv_b": jnp.zeros((1, 3 * H), f32),
            "ao_w": nrm((H, H)), "ao_b": jnp.zeros((1, H), f32),
            "ao_ln_g": jnp.ones((1, H), f32), "ao_ln_b": jnp.zeros((1, H), f32),
            "i_w": nrm((H, I)), "i_b": jnp.zeros((1, I), f32),
            "o_w": nrm((I, H)), "o_b": jnp.zeros((1, H), f32),
            "o_ln_g": jnp.ones((1, H), f32), "o_ln_b": jnp.zeros((1, H), f32),
        })
    return params


def electra_discriminator_forward(params, data, attention_mask, labels, cfg):
    B, S = data.shape
    H = cfg["hidden_size"]
    nH = cfg["num_attention_heads"]
    Dh = H // nH

    # --- outer nn.Embedding lookup (token-id gather kept as plain-JAX glue) ---
    inputs_embeds = jnp.take(params["embed_weight"], data, axis=0)    # (B, S, E)

    # --- ElectraEmbeddings (+pos, +token_type(0), LN) fused with embeddings_project
    h3 = pallas_embed_ln_proj(inputs_embeds,
                              params["pos_emb"][:S],
                              params["tok_type_emb"][0:1],
                              params["emb_ln_g"], params["emb_ln_b"],
                              params["proj_w"], params["proj_b"])     # (B,S,H) bf16
    h2d = h3.reshape(B * S, H)

    mask_f = attention_mask.astype(jnp.float32)
    mask_att = mask_f.reshape(B, 1, S)        # additive -10000 bias built in-kernel

    scale = 1.0 / math.sqrt(Dh)
    for layer in params["layers"]:
        # fused QKV projection; flash attention gridded over (B, heads, KV tiles)
        qkv = pallas_linear(h2d, layer["qkv_w"], layer["qkv_b"])      # (B*S, 3H)
        ctx2d = pallas_attention(qkv, mask_att, B, S, nH, Dh, scale)  # (B*S, H)
        # attention output projection fused with residual-add + LayerNorm
        h2d = pallas_linear_add_ln(ctx2d, layer["ao_w"], layer["ao_b"],
                                   h2d, layer["ao_ln_g"], layer["ao_ln_b"])
        # feed-forward: intermediate (GELU) + output projection fused with add+LN
        inter = pallas_linear(h2d, layer["i_w"], layer["i_b"], activation="gelu")
        h2d = pallas_linear_add_ln(inter, layer["o_w"], layer["o_b"],
                                   h2d, layer["o_ln_g"], layer["o_ln_b"])

    # --- discriminator head: tiled dense+GELU, then lane-dense logit/loss kernel ---
    d = pallas_linear(h2d, params["dh_w"], params["dh_b"], activation="gelu")
    loss, scores_row = pallas_logit_loss(d, params["dp_w"], params["dp_b"],
                                         mask_f.reshape(1, B * S),
                                         labels.astype(jnp.float32).reshape(1, B * S))
    return loss[0, 0], scores_row.reshape(B, S)


# ----------------------------------- main ----------------------------------- #

if __name__ == "__main__":
    cfg = dict(vocab_size=20, embedding_size=16, hidden_size=32,
               num_hidden_layers=2, num_attention_heads=4,
               intermediate_size=64, max_position_embeddings=8)
    B, S = 2, 8

    key = jax.random.PRNGKey(0)
    pkey, dkey, lkey = jax.random.split(key, 3)
    params = init_params(pkey, cfg)

    data = jax.random.randint(dkey, (B, S), 0, cfg["vocab_size"], dtype=jnp.int32)
    attention_mask = jnp.array([[1, 1, 1, 1, 1, 1, 0, 0],
                                [1, 1, 1, 1, 1, 0, 0, 0]], dtype=jnp.int32)
    labels = jax.random.randint(lkey, (B, S), 0, 2, dtype=jnp.int32)

    loss, scores = electra_discriminator_forward(params, data, attention_mask,
                                                 labels, cfg)
    jax.block_until_ready((loss, scores))
    assert scores.shape == (B, S)
    assert bool(jnp.isfinite(loss))
    assert bool(jnp.all((scores >= 0.0) & (scores <= 1.0)))
    print("KERNEL_OK")
</pallas_src>

<mosaic_0001>
module attributes {stable_mosaic.version = 11 : i64} {
  func.func @_embed_ln_proj_kernel(%arg0: i32, %arg1: i32, %arg2: memref<1x8x16xf32, #tpu.memory_space<vmem>>, %arg3: memref<8x16xf32, #tpu.memory_space<vmem>>, %arg4: memref<1x16xf32, #tpu.memory_space<vmem>>, %arg5: memref<1x16xf32, #tpu.memory_space<vmem>>, %arg6: memref<1x16xf32, #tpu.memory_space<vmem>>, %arg7: memref<16x32xbf16, #tpu.memory_space<vmem>>, %arg8: memref<1x32xf32, #tpu.memory_space<vmem>>, %arg9: memref<1x8x32xbf16, #tpu.memory_space<vmem>>) attributes {dimension_semantics = [#tpu.dimension_semantics<parallel>, #tpu.dimension_semantics<parallel>], iteration_bounds = array<i64: 2, 1>, scalar_prefetch = 0 : i64, scratch_operands = 0 : i64, tpu.core_type = #tpu.core_type<tc>, window_params = [{transform_indices = @transform_0, window_bounds = array<i64: 1, 8, 16>}, {pipeline_mode = #tpu.pipeline_mode<synchronous>, transform_indices = @transform_1, window_bounds = array<i64: 8, 16>}, {pipeline_mode = #tpu.pipeline_mode<synchronous>, transform_indices = @transform_2, window_bounds = array<i64: 1, 16>}, {pipeline_mode = #tpu.pipeline_mode<synchronous>, transform_indices = @transform_3, window_bounds = array<i64: 1, 16>}, {pipeline_mode = #tpu.pipeline_mode<synchronous>, transform_indices = @transform_4, window_bounds = array<i64: 1, 16>}, {transform_indices = @transform_5, window_bounds = array<i64: 16, 32>}, {transform_indices = @transform_6, window_bounds = array<i64: 1, 32>}, {transform_indices = @transform_7, window_bounds = array<i64: 1, 8, 32>}]} {
    %c0 = arith.constant 0 : index
    %c0_0 = arith.constant 0 : index
    %c0_1 = arith.constant 0 : index
    %0 = vector.load %arg2[%c0, %c0_0, %c0_1] : memref<1x8x16xf32, #tpu.memory_space<vmem>>, vector<1x8x16xf32>
    %1 = vector.shape_cast %0 : vector<1x8x16xf32> to vector<8x16xf32>
    %c0_2 = arith.constant 0 : index
    %c0_3 = arith.constant 0 : index
    %2 = vector.load %arg3[%c0_2, %c0_3] : memref<8x16xf32, #tpu.memory_space<vmem>>, vector<8x16xf32>
    %3 = arith.addf %1, %2 : vector<8x16xf32>
    %c0_4 = arith.constant 0 : index
    %c0_5 = arith.constant 0 : index
    %4 = vector.load %arg4[%c0_4, %c0_5] : memref<1x16xf32, #tpu.memory_space<vmem>>, vector<1x16xf32>
    %5 = vector.broadcast %4 : vector<1x16xf32> to vector<8x16xf32>
    %6 = arith.addf %3, %5 : vector<8x16xf32>
    %cst = arith.constant dense<0.000000e+00> : vector<8xf32>
    %7 = vector.multi_reduction <add>, %6, %cst [1] : vector<8x16xf32> to vector<8xf32>
    %8 = vector.shape_cast %7 : vector<8xf32> to vector<8x1xf32>
    %cst_6 = arith.constant 1.600000e+01 : f32
    %9 = vector.broadcast %cst_6 : f32 to vector<8x1xf32>
    %10 = arith.divf %8, %9 : vector<8x1xf32>
    %11 = vector.broadcast %10 : vector<8x1xf32> to vector<8x16xf32>
    %12 = arith.subf %6, %11 : vector<8x16xf32>
    %13 = arith.mulf %12, %12 : vector<8x16xf32>
    %cst_7 = arith.constant dense<0.000000e+00> : vector<8xf32>
    %14 = vector.multi_reduction <add>, %13, %cst_7 [1] : vector<8x16xf32> to vector<8xf32>
    %15 = vector.shape_cast %14 : vector<8xf32> to vector<8x1xf32>
    %cst_8 = arith.constant 1.600000e+01 : f32
    %16 = vector.broadcast %cst_8 : f32 to vector<8x1xf32>
    %17 = arith.divf %15, %16 : vector<8x1xf32>
    %18 = vector.broadcast %10 : vector<8x1xf32> to vector<8x16xf32>
    %19 = arith.subf %6, %18 : vector<8x16xf32>
    %cst_9 = arith.constant 9.99999996E-13 : f32
    %20 = vector.broadcast %cst_9 : f32 to vector<8x1xf32>
    %21 = arith.addf %17, %20 : vector<8x1xf32>
    %22 = math.rsqrt %21 : vector<8x1xf32>
    %23 = vector.broadcast %22 : vector<8x1xf32> to vector<8x16xf32>
    %24 = arith.mulf %19, %23 : vector<8x16xf32>
    %c0_10 = arith.constant 0 : index
    %c0_11 = arith.constant 0 : index
    %25 = vector.load %arg5[%c0_10, %c0_11] : memref<1x16xf32, #tpu.memory_space<vmem>>, vector<1x16xf32>
    %26 = vector.broadcast %25 : vector<1x16xf32> to vector<8x16xf32>
    %27 = arith.mulf %24, %26 : vector<8x16xf32>
    %c0_12 = arith.constant 0 : index
    %c0_13 = arith.constant 0 : index
    %28 = vector.load %arg6[%c0_12, %c0_13] : memref<1x16xf32, #tpu.memory_space<vmem>>, vector<1x16xf32>
    %29 = vector.broadcast %28 : vector<1x16xf32> to vector<8x16xf32>
    %30 = arith.addf %27, %29 : vector<8x16xf32>
    %31 = arith.truncf %30 : vector<8x16xf32> to vector<8x16xbf16>
    %c0_14 = arith.constant 0 : index
    %c0_15 = arith.constant 0 : index
    %32 = vector.load %arg7[%c0_14, %c0_15] : memref<16x32xbf16, #tpu.memory_space<vmem>>, vector<16x32xbf16>
    %cst_16 = arith.constant dense<0.000000e+00> : vector<8x32xf32>
    %33 = tpu.matmul %31, %32, %cst_16 {dimension_numbers = #tpu.dot_dimension_numbers<[1], [0], [0], [1], [0, 0, 1, 1], [], []>} : vector<8x16xbf16>, vector<16x32xbf16>, vector<8x32xf32> -> vector<8x32xf32>
    %c0_17 = arith.constant 0 : index
    %c0_18 = arith.constant 0 : index
    %34 = vector.load %arg8[%c0_17, %c0_18] : memref<1x32xf32, #tpu.memory_space<vmem>>, vector<1x32xf32>
    %35 = vector.broadcast %34 : vector<1x32xf32> to vector<8x32xf32>
    %36 = arith.addf %33, %35 : vector<8x32xf32>
    %37 = arith.truncf %36 : vector<8x32xf32> to vector<8x32xbf16>
    %c0_19 = arith.constant 0 : index
    %c0_20 = arith.constant 0 : index
    %c0_21 = arith.constant 0 : index
    %38 = vector.load %arg9[%c0_19, %c0_20, %c0_21] : memref<1x8x32xbf16, #tpu.memory_space<vmem>>, vector<1x8x32xbf16>
    %39 = vector.shape_cast %38 : vector<1x8x32xbf16> to vector<8x32xbf16>
    %40 = vector.shape_cast %37 : vector<8x32xbf16> to vector<1x8x32xbf16>
    tpu.vector_store %arg9[%c0_19, %c0_20, %c0_21], %40 {strides = array<i32>} : memref<1x8x32xbf16, #tpu.memory_space<vmem>>, vector<1x8x32xbf16>,
    return
  }
  func.func @transform_0(%arg0: i32, %arg1: i32) -> (i32, i32, i32) {
    %c0_i32 = arith.constant 0 : i32
    %c0_i32_0 = arith.constant 0 : i32
    %c0_i32_1 = arith.constant 0 : i32
    return %arg0, %c0_i32, %c0_i32_0 : i32, i32, i32
  }
  func.func @transform_1(%arg0: i32, %arg1: i32) -> (i32, i32) {
    %c0_i32 = arith.constant 0 : i32
    %c0_i32_0 = arith.constant 0 : i32
    %c0_i32_1 = arith.constant 0 : i32
    return %c0_i32, %c0_i32_0 : i32, i32
  }
  func.func @transform_2(%arg0: i32, %arg1: i32) -> (i32, i32) {
    %c0_i32 = arith.constant 0 : i32
    %c0_i32_0 = arith.constant 0 : i32
    %c0_i32_1 = arith.constant 0 : i32
    return %c0_i32, %c0_i32_0 : i32, i32
  }
  func.func @transform_3(%arg0: i32, %arg1: i32) -> (i32, i32) {
    %c0_i32 = arith.constant 0 : i32
    %c0_i32_0 = arith.constant 0 : i32
    %c0_i32_1 = arith.constant 0 : i32
    return %c0_i32, %c0_i32_0 : i32, i32
  }
  func.func @transform_4(%arg0: i32, %arg1: i32) -> (i32, i32) {
    %c0_i32 = arith.constant 0 : i32
    %c0_i32_0 = arith.constant 0 : i32
    %c0_i32_1 = arith.constant 0 : i32
    return %c0_i32, %c0_i32_0 : i32, i32
  }
  func.func @transform_5(%arg0: i32, %arg1: i32) -> (i32, i32) {
    %c0_i32 = arith.constant 0 : i32
    %c0_i32_0 = arith.constant 0 : i32
    return %c0_i32, %arg1 : i32, i32
  }
  func.func @transform_6(%arg0: i32, %arg1: i32) -> (i32, i32) {
    %c0_i32 = arith.constant 0 : i32
    %c0_i32_0 = arith.constant 0 : i32
    return %c0_i32, %arg1 : i32, i32
  }
  func.func @transform_7(%arg0: i32, %arg1: i32) -> (i32, i32, i32) {
    %c0_i32 = arith.constant 0 : i32
    %c0_i32_0 = arith.constant 0 : i32
    return %arg0, %c0_i32, %arg1 : i32, i32, i32
  }
}

</mosaic_0001>

<llo_original>
// kernel: tpu_custom_call.1
$region0: #{tpu_custom_call.1}
  #allocation0 [shape = 'u32[]', space=smem, size = 0x4, offset = 0x4, fixed_abs, tag = 'smem constant byte address 0x4 - core index']
  #allocation1 [shape = 'u32[144,128]{1,0:T(1,128)}', space=vmem, size = 0x12000, scoped, tag = 'internal scratch']
  %s0 = inlined_call_operand.hbm [shape: f32[2,8,16], index: 0, kind: input, shape index: {}]
  %s1 = inlined_call_operand.hbm [shape: f32[8,16], index: 1, kind: input, shape index: {}]
  %s2 = inlined_call_operand.vmem [shape: f32[1,16], index: 2, kind: input, shape index: {}]
  %s3 = inlined_call_operand.hbm [shape: f32[1,16], index: 3, kind: input, shape index: {}]
  %s4 = inlined_call_operand.hbm [shape: f32[1,16], index: 4, kind: input, shape index: {}]
  %s5 = inlined_call_operand.vmem [shape: bf16[16,32], index: 5, kind: input, shape index: {}]
  %s6 = inlined_call_operand.vmem [shape: f32[1,32], index: 6, kind: input, shape index: {}]
  %s7 = inlined_call_operand.hbm [shape: bf16[2,8,32], index: 7, kind: output, shape index: {}]
  %s8 = sld [smem:[#allocation0]]
  $region77: #{tpu_custom_call.1} parent=0
    _
  %s10 = ssub.s32 1, %s8
  %s11 = scalar_select 0, %s10, %s8
  $region1: #{tpu_custom_call.1} parent=0
    #allocation2 [shape = 'u8[8192]{0}', space=vmem, size = 0x2000, scoped, tag = 'input window, operand 0']
    #allocation3 [shape = 's32[2]{0}', space=sflag, size = 0x8, scoped, tag = 'scoped memory for tpu_custom_call.1']
    #allocation4 [shape = 's32[2]{0}', space=sflag, size = 0x8, scoped, tag = 'scoped memory for tpu_custom_call.1']
    #allocation5 [shape = 'u8[4096]{0}', space=vmem, size = 0x1000, scoped, tag = 'input window, operand 1, single buffered']
    #allocation6 [shape = 's32[1]{0}', space=sflag, size = 0x4, scoped, tag = 'scoped memory for tpu_custom_call.1']
    #allocation7 [shape = 'u8[512]{0}', space=vmem, size = 0x400, scoped, tag = 'input window, operand 3, single buffered']
    #allocation8 [shape = 'u8[512]{0}', space=vmem, size = 0x400, scoped, tag = 'input window, operand 4, single buffered']
    #allocation9 [shape = 's32[1]{0}', space=sflag, size = 0x4, scoped, tag = 'scoped memory for tpu_custom_call.1']
    #allocation10 [shape = 'u8[4096]{0}', space=vmem, size = 0x1000, scoped, tag = 'output window, operand 0']
    %12 = vsyncpa [#allocation3], 0
    %s13 = scalar_lea.sflag [#allocation3], 1
    %14 = vsyncpa %s13, 0
    %15 = vsyncpa [#allocation6], 0
    %16 = vsyncpa [#allocation9], 0
    %17 = vsyncpa [#allocation4], 0
    %s18 = scalar_lea.sflag [#allocation4], 1
    %19 = vsyncpa %s18, 0
    loop: start=0, step=1, limit=4
    $region2: #{tpu_custom_call.1} parent=1 // loop_pre_header
      _
    $region3: #{tpu_custom_call.1} parent=1 // loop_header
      %s21 = sphi 0, %s25
      %p22 = scmp.ge.s32.totalorder %s21, 4
      %s28 = sphi 0, %s40
      %s29 = sphi 0, %s36
      %s30 = sphi 0, %s28
      %s31 = sphi 0, %s29
      %s32 = sphi 0, %s30
      %s33 = sphi 0, %s31
      %s43 = sphi 0, %s45
      %s46 = sphi 0, %s43
      %s47 = sphi 0, %s46
      %s63 = sphi 0, %s47
      %s67 = sphi 0, %s67
      %s69 = sphi 0, %s67
      %s70 = sphi 0, %s69
      %s84 = sphi 0, %s70
      %s88 = sphi 0, %s88
      %s90 = sphi 0, %s88
      %s91 = sphi 0, %s90
      %s105 = sphi 0, %s91
      %s109 = sphi 0, %s109
      %s111 = sphi 0, %s109
      %s112 = sphi 0, %s111
      %s126 = sphi 0, %s112
      %s130 = sphi 0, %s130
      %s132 = sphi 0, %s130
      %s133 = sphi 0, %s132
      %s147 = sphi 0, %s133
      %s153 = sphi 0, %s155
      %s156 = sphi 0, %s153
      %s157 = sphi 0, %s156
      %s173 = sphi 0, %s157
      %s179 = sphi 0, %s181
      %s182 = sphi 0, %s179
      %s183 = sphi 0, %s182
      %s199 = sphi 0, %s183
      %s207 = sphi 0, %s209
      %s210 = sphi 0, %s207
      %s211 = sphi 0, %s210
      %s227 = sphi 0, %s211
    $region4: #{tpu_custom_call.1} parent=1 // loop_header_branch
      %24 = sbr.rel (%p22) target = $region8
    $region5: #{tpu_custom_call.1} parent=1 // loop_body
      %s26 = ssub.s32 %s21, 1
      %s27 = ssub.s32 %s21, 2
      %s34 = sadd.s32 1, %s29
      %p35 = scmp.ge.s32.totalorder %s34, 1
      %s36 = scalar_select %p35, 0, %s34
      %s37 = sadd.s32 1, %s28
      %s38 = scalar_select %p35, %s37, %s28
      %p39 = scmp.ge.s32.totalorder %s38, 2
      %s40 = scalar_select %p39, 0, %s38
      %s41 = ssub.s32 %s28, %s40
      %p42 = scmp.eq.s32.totalorder %s41, 0
      %s44 = sadd.s32 %s43, 1
      %s45 = scalar_select %p42, %s43, %s44
      %p48 = pneg %p42
      %p49 = scmp.eq.s32.totalorder %s21, 1
      %p50 = por %p48, %p49
      %p51 = scmp.ne.s32.totalorder %s43, %s46
      %p52 = scmp.eq.s32.totalorder %s21, 0
      %p53 = por %p51, %p52
      %p54 = scmp.ne.s32.totalorder %s43, %s46
      %p55 = scmp.eq.s32.totalorder %s26, 1
      %p56 = por %p54, %p55
      %p57 = scmp.ne.s32.totalorder %s46, %s47
      %p58 = scmp.eq.s32.totalorder %s26, 0
      %p59 = por %p57, %p58
      %p60 = scmp.ne.s32.totalorder %s46, %s47
      %p61 = scmp.eq.s32.totalorder %s27, 1
      %p62 = por %p60, %p61
      %p64 = scmp.ne.s32.totalorder %s47, %s63
      %p65 = scmp.eq.s32.totalorder %s27, 0
      %p66 = por %p64, %p65
      %s68 = sadd.s32 %s67, 1
      %p71 = scmp.eq.s32.totalorder %s21, 1
      %p72 = scmp.ne.s32.totalorder %s67, %s69
      %p73 = scmp.eq.s32.totalorder %s21, 0
      %p74 = por %p72, %p73
      %p75 = scmp.ne.s32.totalorder %s67, %s69
      %p76 = scmp.eq.s32.totalorder %s26, 1
      %p77 = por %p75, %p76
      %p78 = scmp.ne.s32.totalorder %s69, %s70
      %p79 = scmp.eq.s32.totalorder %s26, 0
      %p80 = por %p78, %p79
      %p81 = scmp.ne.s32.totalorder %s69, %s70
      %p82 = scmp.eq.s32.totalorder %s27, 1
      %p83 = por %p81, %p82
      %p85 = scmp.ne.s32.totalorder %s70, %s84
      %p86 = scmp.eq.s32.totalorder %s27, 0
      %p87 = por %p85, %p86
      %s89 = sadd.s32 %s88, 1
      %p92 = scmp.eq.s32.totalorder %s21, 1
      %p93 = scmp.ne.s32.totalorder %s88, %s90
      %p94 = scmp.eq.s32.totalorder %s21, 0
      %p95 = por %p93, %p94
      %p96 = scmp.ne.s32.totalorder %s88, %s90
      %p97 = scmp.eq.s32.totalorder %s26, 1
      %p98 = por %p96, %p97
      %p99 = scmp.ne.s32.totalorder %s90, %s91
      %p100 = scmp.eq.s32.totalorder %s26, 0
      %p101 = por %p99, %p100
      %p102 = scmp.ne.s32.totalorder %s90, %s91
      %p103 = scmp.eq.s32.totalorder %s27, 1
      %p104 = por %p102, %p103
      %p106 = scmp.ne.s32.totalorder %s91, %s105
      %p107 = scmp.eq.s32.totalorder %s27, 0
      %p108 = por %p106, %p107
      %s110 = sadd.s32 %s109, 1
      %p113 = scmp.eq.s32.totalorder %s21, 1
      %p114 = scmp.ne.s32.totalorder %s109, %s111
      %p115 = scmp.eq.s32.totalorder %s21, 0
      %p116 = por %p114, %p115
      %p117 = scmp.ne.s32.totalorder %s109, %s111
      %p118 = scmp.eq.s32.totalorder %s26, 1
      %p119 = por %p117, %p118
      %p120 = scmp.ne.s32.totalorder %s111, %s112
      %p121 = scmp.eq.s32.totalorder %s26, 0
      %p122 = por %p120, %p121
      %p123 = scmp.ne.s32.totalorder %s111, %s112
      %p124 = scmp.eq.s32.totalorder %s27, 1
      %p125 = por %p123, %p124
      %p127 = scmp.ne.s32.totalorder %s112, %s126
      %p128 = scmp.eq.s32.totalorder %s27, 0
      %p129 = por %p127, %p128
      %s131 = sadd.s32 %s130, 1
      %p134 = scmp.eq.s32.totalorder %s21, 1
      %p135 = scmp.ne.s32.totalorder %s130, %s132
      %p136 = scmp.eq.s32.totalorder %s21, 0
      %p137 = por %p135, %p136
      %p138 = scmp.ne.s32.totalorder %s130, %s132
      %p139 = scmp.eq.s32.totalorder %s26, 1
      %p140 = por %p138, %p139
      %p141 = scmp.ne.s32.totalorder %s132, %s133
      %p142 = scmp.eq.s32.totalorder %s26, 0
      %p143 = por %p141, %p142
      %p144 = scmp.ne.s32.totalorder %s132, %s133
      %p145 = scmp.eq.s32.totalorder %s27, 1
      %p146 = por %p144, %p145
      %p148 = scmp.ne.s32.totalorder %s133, %s147
      %p149 = scmp.eq.s32.totalorder %s27, 0
      %p150 = por %p148, %p149
      %s151 = ssub.s32 %s29, %s36
      %p152 = scmp.eq.s32.totalorder %s151, 0
      %s154 = sadd.s32 %s153, 1
      %s155 = scalar_select %p152, %s153, %s154
      %p158 = pneg %p152
      %p159 = scmp.eq.s32.totalorder %s21, 1
      %p160 = por %p158, %p159
      %p161 = scmp.ne.s32.totalorder %s153, %s156
      %p162 = scmp.eq.s32.totalorder %s21, 0
      %p163 = por %p161, %p162
      %p164 = scmp.ne.s32.totalorder %s153, %s156
      %p165 = scmp.eq.s32.totalorder %s26, 1
      %p166 = por %p164, %p165
      %p167 = scmp.ne.s32.totalorder %s156, %s157
      %p168 = scmp.eq.s32.totalorder %s26, 0
      %p169 = por %p167, %p168
      %p170 = scmp.ne.s32.totalorder %s156, %s157
      %p171 = scmp.eq.s32.totalorder %s27, 1
      %p172 = por %p170, %p171
      %p174 = scmp.ne.s32.totalorder %s157, %s173
      %p175 = scmp.eq.s32.totalorder %s27, 0
      %p176 = por %p174, %p175
      %s177 = ssub.s32 %s29, %s36
      %p178 = scmp.eq.s32.totalorder %s177, 0
      %s180 = sadd.s32 %s179, 1
      %s181 = scalar_select %p178, %s179, %s180
      %p184 = pneg %p178
      %p185 = scmp.eq.s32.totalorder %s21, 1
      %p186 = por %p184, %p185
      %p187 = scmp.ne.s32.totalorder %s179, %s182
      %p188 = scmp.eq.s32.totalorder %s21, 0
      %p189 = por %p187, %p188
      %p190 = scmp.ne.s32.totalorder %s179, %s182
      %p191 = scmp.eq.s32.totalorder %s26, 1
      %p192 = por %p190, %p191
      %p193 = scmp.ne.s32.totalorder %s182, %s183
      %p194 = scmp.eq.s32.totalorder %s26, 0
      %p195 = por %p193, %p194
      %p196 = scmp.ne.s32.totalorder %s182, %s183
      %p197 = scmp.eq.s32.totalorder %s27, 1
      %p198 = por %p196, %p197
      %p200 = scmp.ne.s32.totalorder %s183, %s199
      %p201 = scmp.eq.s32.totalorder %s27, 0
      %p202 = por %p200, %p201
      %s203 = ssub.s32 %s28, %s40
      %s204 = ssub.s32 %s29, %s36
      %s205 = sor.u32 %s203, %s204
      %p206 = scmp.eq.s32.totalorder %s205, 0
      %s208 = sadd.s32 %s207, 1
      %s209 = scalar_select %p206, %s207, %s208
      %p212 = pneg %p206
      %p213 = scmp.eq.s32.totalorder %s21, 1
      %p214 = por %p212, %p213
      %p215 = scmp.ne.s32.totalorder %s207, %s210
      %p216 = scmp.eq.s32.totalorder %s21, 0
      %p217 = por %p215, %p216
      %p218 = scmp.ne.s32.totalorder %s207, %s210
      %p219 = scmp.eq.s32.totalorder %s26, 1
      %p220 = por %p218, %p219
      %p221 = scmp.ne.s32.totalorder %s210, %s211
      %p222 = scmp.eq.s32.totalorder %s26, 0
      %p223 = por %p221, %p222
      %p224 = scmp.ne.s32.totalorder %s210, %s211
      %p225 = scmp.eq.s32.totalorder %s27, 1
      %p226 = por %p224, %p225
      %p228 = scmp.ne.s32.totalorder %s211, %s227
      %p229 = scmp.eq.s32.totalorder %s27, 0
      %p230 = por %p228, %p229
      %p231 = scmp.le.s32.totalorder 1, %s21
      %p232 = scmp.lt.s32.totalorder %s21, 3
      %p233 = pnand %p231, %p232
      %p234 = pneg %p233
      // Predicated region
      $region9: #{tpu_custom_call.1} parent=5 // pred_check
        _
      $region10: #{tpu_custom_call.1} parent=5 // pred_check_branch
        %236 = sbr.rel (%p233) target = $region12
      $region11: #{tpu_custom_call.1} parent=5 // pred_region
        %s237 = ssub.s32 %s21, 1
        // Predicated region
        $region13: #{tpu_custom_call.1} parent=11 // pred_check
          %p238 = pneg %p80
        $region14: #{tpu_custom_call.1} parent=11 // pred_check_branch
          %240 = sbr.rel (%p238) target = $region16
        $region15: #{tpu_custom_call.1} parent=11 // pred_region
          %s242 = ssub.s32 128, 128
          %243 = vsyncadd [#allocation6], %s242
          %s245 = sshll.u32 [#allocation5], 4
          %s246 = int_to_ptr.vmem [resolvable:$true] %s245
          %248 = dma.hbm_to_vmem [thread:$0]  %s1, 128, %s246, [#allocation6]
        $region16: #{tpu_custom_call.1} parent=11 // pred_fallthru
          _
        // Predicated region
        $region17: #{tpu_custom_call.1} parent=11 // pred_check
          %p249 = pneg %p101
        $region18: #{tpu_custom_call.1} parent=11 // pred_check_branch
          %251 = sbr.rel (%p249) target = $region20
        $region19: #{tpu_custom_call.1} parent=11 // pred_region
          _
        $region20: #{tpu_custom_call.1} parent=11 // pred_fallthru
          _
        // Predicated region
        $region21: #{tpu_custom_call.1} parent=11 // pred_check
          %p252 = pneg %p122
        $region22: #{tpu_custom_call.1} parent=11 // pred_check_branch
          %254 = sbr.rel (%p252) target = $region24
        $region23: #{tpu_custom_call.1} parent=11 // pred_region
          %s256 = ssub.s32 16, 16
          %257 = vsyncadd [#allocation6], %s256
          %s259 = sshll.u32 [#allocation7], 4
          %s260 = int_to_ptr.vmem [resolvable:$true] %s259
          %262 = dma.hbm_to_vmem [thread:$0]  %s3, 16, %s260, [#allocation6]
        $region24: #{tpu_custom_call.1} parent=11 // pred_fallthru
          _
        // Predicated region
        $region25: #{tpu_custom_call.1} parent=11 // pred_check
          %p263 = pneg %p143
        $region26: #{tpu_custom_call.1} parent=11 // pred_check_branch
          %265 = sbr.rel (%p263) target = $region28
        $region27: #{tpu_custom_call.1} parent=11 // pred_region
          %s267 = ssub.s32 16, 16
          %268 = vsyncadd [#allocation9], %s267
          %s270 = sshll.u32 [#allocation8], 4
          %s271 = int_to_ptr.vmem [resolvable:$true] %s270
          %273 = dma.hbm_to_vmem [thread:$0]  %s4, 16, %s271, [#allocation9]
        $region28: #{tpu_custom_call.1} parent=11 // pred_fallthru
          _
        // Predicated region
        $region29: #{tpu_custom_call.1} parent=11 // pred_check
          %p274 = pneg %p169
        $region30: #{tpu_custom_call.1} parent=11 // pred_check_branch
          %276 = sbr.rel (%p274) target = $region32
        $region31: #{tpu_custom_call.1} parent=11 // pred_region
          %p277 = scmp.lt.s32.totalorder %s31, 0
          %s278 = scalar_select %p277, %s31, 0
          %s279 = smul.addr %s278, 4
          %s280 = scalar_lea.vmem %s5, %s279
        $region32: #{tpu_custom_call.1} parent=11 // pred_fallthru
          _
        // Predicated region
        $region33: #{tpu_custom_call.1} parent=11 // pred_check
          %p281 = pneg %p195
        $region34: #{tpu_custom_call.1} parent=11 // pred_check_branch
          %283 = sbr.rel (%p281) target = $region36
        $region35: #{tpu_custom_call.1} parent=11 // pred_region
          %p284 = scmp.lt.s32.totalorder %s31, 0
          %s285 = scalar_select %p284, %s31, 0
          %s286 = scalar_lea.vmem %s6, %s285
        $region36: #{tpu_custom_call.1} parent=11 // pred_fallthru
          _
      $region12: #{tpu_custom_call.1} parent=5 // pred_fallthru
        _
      %p287 = scmp.lt.s32.totalorder %s21, 2
      // Predicated region
      $region37: #{tpu_custom_call.1} parent=5 // pred_check
        %p288 = pneg %p287
      $region38: #{tpu_custom_call.1} parent=5 // pred_check_branch
        %290 = sbr.rel (%p288) target = $region40
      $region39: #{tpu_custom_call.1} parent=5 // pred_region
        // Predicated region
        $region41: #{tpu_custom_call.1} parent=39 // pred_check
          %p291 = pneg %p53
        $region42: #{tpu_custom_call.1} parent=39 // pred_check_branch
          %293 = sbr.rel (%p291) target = $region44
        $region43: #{tpu_custom_call.1} parent=39 // pred_region
          %s294 = sand.u32 %s43, 1
          %s295 = scalar_lea.sflag [#allocation3], %s294
          %s296 = sand.u32 %s43, 1
          %s297 = smul.addr %s296, 8
          %s298 = scalar_lea.vmem [#allocation2], %s297
          %s300 = ssub.s32 128, 128
          %301 = vsyncadd %s295, %s300
          %s302 = smul.addr %s28, 128
          %s303 = scalar_lea.hbm %s0, %s302
          %s305 = sshll.u32 %s298, 4
          %s306 = int_to_ptr.vmem [resolvable:$true] %s305
          %308 = dma.hbm_to_vmem [thread:$0]  %s303, 128, %s306, %s295
        $region44: #{tpu_custom_call.1} parent=39 // pred_fallthru
          _
      $region40: #{tpu_custom_call.1} parent=5 // pred_fallthru
        _
      %p309 = scmp.le.s32.totalorder 1, %s21
      %p310 = scmp.lt.s32.totalorder %s21, 3
      %p311 = pnand %p309, %p310
      %p312 = pneg %p311
      // Predicated region
      $region45: #{tpu_custom_call.1} parent=5 // pred_check
        _
      $region46: #{tpu_custom_call.1} parent=5 // pred_check_branch
        %314 = sbr.rel (%p311) target = $region48
      $region47: #{tpu_custom_call.1} parent=5 // pred_region
        %s315 = ssub.s32 %s21, 1
        %s316 = sand.u32 %s46, 1
        %s317 = scalar_lea.sflag [#allocation3], %s316
        %s318 = sand.u32 %s46, 1
        %s319 = smul.addr %s318, 8
        %s320 = scalar_lea.vmem [#allocation2], %s319
        // Predicated region
        $region49: #{tpu_custom_call.1} parent=47 // pred_check
          %p321 = pneg %p59
        $region50: #{tpu_custom_call.1} parent=47 // pred_check_branch
          %323 = sbr.rel (%p321) target = $region52
        $region51: #{tpu_custom_call.1} parent=47 // pred_region
          %324 = dma.done %s317, 128
        $region52: #{tpu_custom_call.1} parent=47 // pred_fallthru
          _
        // Predicated region
        $region53: #{tpu_custom_call.1} parent=47 // pred_check
          %p325 = pneg %p80
        $region54: #{tpu_custom_call.1} parent=47 // pred_check_branch
          %327 = sbr.rel (%p325) target = $region56
        $region55: #{tpu_custom_call.1} parent=47 // pred_region
          %328 = dma.done [#allocation6], 128
        $region56: #{tpu_custom_call.1} parent=47 // pred_fallthru
          _
        // Predicated region
        $region57: #{tpu_custom_call.1} parent=47 // pred_check
          %p329 = pneg %p122
        $region58: #{tpu_custom_call.1} parent=47 // pred_check_branch
          %331 = sbr.rel (%p329) target = $region60
        $region59: #{tpu_custom_call.1} parent=47 // pred_region
          %332 = dma.done [#allocation6], 16
        $region60: #{tpu_custom_call.1} parent=47 // pred_fallthru
          _
        // Predicated region
        $region61: #{tpu_custom_call.1} parent=47 // pred_check
          %p333 = pneg %p143
        $region62: #{tpu_custom_call.1} parent=47 // pred_check_branch
          %335 = sbr.rel (%p333) target = $region64
        $region63: #{tpu_custom_call.1} parent=47 // pred_region
          %336 = dma.done [#allocation9], 16
        $region64: #{tpu_custom_call.1} parent=47 // pred_fallthru
          _
        %s337 = sand.u32 %s46, 1
        %s338 = scalar_lea.sflag [#allocation3], %s337
        %s339 = sand.u32 %s46, 1
        %s340 = smul.addr %s339, 8
        %s341 = scalar_lea.vmem [#allocation2], %s340
        %p342 = pneg %p59
        %p343 = pneg %p56
        %p344 = pneg %p80
        %p345 = pneg %p77
        %p346 = pneg %p101
        %p347 = pneg %p98
        %p348 = pneg %p122
        %p349 = pneg %p119
        %p350 = pneg %p143
        %p351 = pneg %p140
        %p352 = scmp.lt.s32.totalorder %s31, 0
        %s353 = scalar_select %p352, %s31, 0
        %s354 = smul.addr %s353, 4
        %s355 = scalar_lea.vmem %s5, %s354
        %p356 = pneg %p169
        %p357 = pneg %p166
        %p358 = scmp.lt.s32.totalorder %s31, 0
        %s359 = scalar_select %p358, %s31, 0
        %s360 = scalar_lea.vmem %s6, %s359
        %p361 = pneg %p195
        %p362 = pneg %p192
        %p363 = pneg %p223
        %p364 = pneg %p220
        %s365 = sand.u32 %s210, 1
        %s366 = scalar_lea.sflag [#allocation4], %s365
        %s367 = sand.u32 %s210, 1
        %s368 = smul.addr %s367, 4
        %s369 = scalar_lea.vmem [#allocation10], %s368
        %p370 = scmp.lt.s32.totalorder %s31, 0
        %s371 = scalar_select %p370, %s31, 0
        %s372 = smul.addr %s371, 4
        %s373 = scalar_lea.vmem %s5, %s372
        %p374 = scmp.lt.s32.totalorder %s31, 0
        %s375 = scalar_select %p374, %s31, 0
        %s376 = scalar_lea.vmem %s6, %s375
        %v378 = vld [vmem:[%s320] sm:$0xff]
        %v379 = vld [vmem:[#allocation5] sm:$0xff]
        %v380 = vadd.f32 %v378, %v379
        %v381 = vld [vmem:[%s2] sm:$0x1]
        %v383 = vlaneseq
        %v384 = vshrl.u32 %v383, 7
        %v385 = vsub.s32 0, %v384
        %v386 = vrot.slane %v381, %v385
        %v388 = vadd.f32 %v380, %v386
        %vm389 = vcmask 130048
        %v390 = vsel %vm389, %v388, 0.0
        %391 = vadd.xlane.f32.xlu0 %v390
        %v392 = vpop.xlane.xlu0 %391
        %v393 = vrcp.pop 16.0
        %v394 = vmul.f32 %v392, %v393
        %v395 = vsub.f32 %v388, %v394
        %v396 = vmul.f32 %v395, %v395
        %v397 = vsel %vm389, %v396, 0.0
        %398 = vadd.xlane.f32.xlu0 %v397
        %v399 = vpop.xlane.xlu0 %398
        %v400 = vmul.f32 %v399, %v393
        %v401 = vadd.f32 %v400, 1e-12
        %v402 = vrsqrt.pop %v401
        %v403 = vmul.f32 %v395, %v402
        %v404 = vld [vmem:[#allocation7] sm:$0x1]
        %v406 = vlaneseq
        %v407 = vshrl.u32 %v406, 7
        %v408 = vsub.s32 0, %v407
        %v409 = vrot.slane %v404, %v408
        %v411 = vmul.f32 %v403, %v409
        %v412 = vld [vmem:[#allocation8] sm:$0x1]
        %v414 = vlaneseq
        %v415 = vshrl.u32 %v414, 7
        %v416 = vsub.s32 0, %v415
        %v417 = vrot.slane %v412, %v416
        %v419 = vadd.f32 %v411, %v417
        %v420 = vpack.c.bf16 %v419, %v419
        %v421 = vld [vmem:[%s373] sm:$0xf]
        %v422 = vld [vmem:[%s373 + $0x4] sm:$0xf]
        %v423 = vld [vmem:[%s376] sm:$0x1]
        %v425 = vlaneseq
        %v426 = vshrl.u32 %v425, 7
        %v427 = vsub.s32 0, %v426
        %v428 = vrot.slane %v423, %v427
        %v432 = vunpack.c.l.b16 %v421
        %v433 = vunpack.c.l.b16 %v422
        %v434 = vpack.c.b16 %v433, %v432
        %v437 = vsel %vm389, %v420, 0
        %439 = vmatprep.subr.bf16.mxu0 0
        %440 = vmatpush1.bf16.msra.mxu0 0
        %441 = vmatprep.subr.bf16.mxu0 0
        %442 = vmatpush1.bf16.msra.mxu0 0
        %443 = vmatprep.subr.bf16.mxu0 0
        %444 = vmatpush1.bf16.msra.mxu0 0
        %445 = vmatprep.subr.bf16.mxu0 0
        %446 = vmatpush1.bf16.msra.mxu0 0
        %447 = vmatprep.subr.bf16.mxu0 0
        %448 = vmatpush1.bf16.msra.mxu0 0
        %449 = vmatprep.subr.bf16.mxu0 0
        %450 = vmatpush1.bf16.msra.mxu0 0
        %451 = vmatprep.subr.bf16.mxu0 0
        %452 = vmatpush1.bf16.msra.mxu0 0
        %453 = vmatprep.subr.bf16.mxu0 0
        %454 = vmatpush1.bf16.msra.mxu0 %v434
        %455 = vmatprep.subr.bf16.mxu0 0
        %456 = vmatpush2.bf16.msra.mxu0 0
        %457 = vmatprep.subr.bf16.mxu0 0
        %458 = vmatpush2.bf16.msra.mxu0 0
        %459 = vmatprep.subr.bf16.mxu0 0
        %460 = vmatpush2.bf16.msra.mxu0 0
        %461 = vmatprep.subr.bf16.mxu0 0
        %462 = vmatpush2.bf16.msra.mxu0 0
        %463 = vmatprep.subr.bf16.mxu0 0
        %464 = vmatpush2.bf16.msra.mxu0 0
        %465 = vmatprep.subr.bf16.mxu0 0
        %466 = vmatpush2.bf16.msra.mxu0 0
        %467 = vmatprep.subr.bf16.mxu0 0
        %468 = vmatpush2.bf16.msra.mxu0 0
        %469 = vmatprep.subr.bf16.mxu0 0
        %470 = vmatpush2.bf16.msra.mxu0 0
        %471 = vmatprep.mubr.bf16.mxu0 0
        %472 = vmatmul.mubr.bf16.gmra.mxu0 %v437
        %v473 = vpop.f32.mrf.mxu0
        %v474 = vadd.f32 %v428, %v473
        %v475 = vpop.f32.mrf.mxu0
        %v476 = vpop.f32.mrf.mxu0
        %v477 = vpop.f32.mrf.mxu0
        %478 = vdwg.mxu0
        %v479 = vpack.c.bf16 %v474, %v474
        %vm480 = vcmask 257024
        %481 = vst.msk [vmem:[%s369] sm:$0xf] %vm480, %v479
        %s482 = sand.u32 %s210, 1
        %s483 = scalar_lea.sflag [#allocation4], %s482
        %s484 = sand.u32 %s210, 1
        %s485 = smul.addr %s484, 4
        %s486 = scalar_lea.vmem [#allocation10], %s485
        // Predicated region
        $region65: #{tpu_custom_call.1} parent=47 // pred_check
          %p487 = pneg %p220
        $region66: #{tpu_custom_call.1} parent=47 // pred_check_branch
          %489 = sbr.rel (%p487) target = $region68
        $region67: #{tpu_custom_call.1} parent=47 // pred_region
          %s491 = ssub.s32 64, 64
          %492 = vsyncadd %s483, %s491
          %s493 = sadd.s32 %s31, %s30
          %s494 = smul.addr %s493, 64
          %s495 = scalar_lea.hbm %s7, %s494
          %s497 = sshll.u32 %s486, 4
          %s498 = int_to_ptr.vmem [resolvable:$true] %s497
          %500 = dma.vmem_to_hbm [thread:$0]  %s498, 64, %s495, %s483
        $region68: #{tpu_custom_call.1} parent=47 // pred_fallthru
          _
      $region48: #{tpu_custom_call.1} parent=5 // pred_fallthru
        _
      %p501 = scmp.le.s32.totalorder 2, %s21
      // Predicated region
      $region69: #{tpu_custom_call.1} parent=5 // pred_check
        %p502 = pneg %p501
      $region70: #{tpu_custom_call.1} parent=5 // pred_check_branch
        %504 = sbr.rel (%p502) target = $region72
      $region71: #{tpu_custom_call.1} parent=5 // pred_region
        %s505 = ssub.s32 %s21, 2
        // Predicated region
        $region73: #{tpu_custom_call.1} parent=71 // pred_check
          %p506 = pneg %p226
        $region74: #{tpu_custom_call.1} parent=71 // pred_check_branch
          %508 = sbr.rel (%p506) target = $region76
        $region75: #{tpu_custom_call.1} parent=71 // pred_region
          %s509 = sand.u32 %s211, 1
          %s510 = scalar_lea.sflag [#allocation4], %s509
          %s511 = sand.u32 %s211, 1
          %s512 = smul.addr %s511, 4
          %s513 = scalar_lea.vmem [#allocation10], %s512
          %514 = dma.done %s510, 64
        $region76: #{tpu_custom_call.1} parent=71 // pred_fallthru
          _
      $region72: #{tpu_custom_call.1} parent=5 // pred_fallthru
        _
    $region6: #{tpu_custom_call.1} parent=1 // loop_footer
      %s25 = sadd.s32 1, %s21
    $region7: #{tpu_custom_call.1} parent=1 // loop_footer_branch
      %20 = sbr.rel target = $region3
    $region8: #{tpu_custom_call.1} parent=1 // loop_exit
      _
    %515 = vsyncpa [#allocation3], 1
    %s516 = scalar_lea.sflag [#allocation3], 1
    %517 = vsyncpa %s516, 1
    %518 = vsyncpa [#allocation6], 1
    %519 = vsyncpa [#allocation9], 1
    %520 = vsyncpa [#allocation4], 1
    %s521 = scalar_lea.sflag [#allocation4], 1
    %522 = vsyncpa %s521, 1

</llo_original>
